<compile_context>
chip_gen: v7x
topology: tpu7x:2x2x1
jax: 0.10.0
libtpu: 0.0.40
codegen_flags: <defaults>
</compile_context>

<pallas_src>
import functools
import math

import jax
import jax.numpy as jnp
from jax.experimental import pallas as pl
from jax.experimental.pallas import tpu as pltpu


# ----------------------------- generation-aware budgets -----------------------------

def _detect_vmem_capacity():
    try:
        return int(pltpu.get_tpu_info().vmem_capacity_bytes)
    except Exception:
        return 128 * 1024 * 1024  # v5e / v6e default


_VMEM_CAP_BYTES = _detect_vmem_capacity()
_SMALL_VMEM = _VMEM_CAP_BYTES <= 64 * 1024 * 1024          # v7x: 64 MiB per TensorCore
# ~48 MiB on v7x (headroom for double-buffering), 96 MiB on v5e/v6e.
_VMEM_LIMIT_BYTES = min((_VMEM_CAP_BYTES * 3) // 4, 96 * 1024 * 1024)


def _compiler_params(semantics):
    return pltpu.CompilerParams(dimension_semantics=semantics,
                                vmem_limit_bytes=_VMEM_LIMIT_BYTES)


# ----------------------------------- tiling helpers -----------------------------------

def _row_tile(n):
    """Row (MXU-M) tile; >=2 grid steps so the BlockSpec pipeline overlaps DMA/compute."""
    prefs = (256, 128) if _SMALL_VMEM else (512, 256, 128)
    for cand in prefs:
        if n % cand == 0 and n // cand >= 2:
            return cand
    return n


def _col_tile(d_out, d_in, nproj, itemsize):
    """d_out slab width for projections; bounded so the double-buffered weight slabs
    of all fused projections stay well inside the scoped-VMEM budget."""
    budget = _VMEM_LIMIT_BYTES // 3
    cands = (512, 256, 128) if _SMALL_VMEM else (1024, 512, 256, 128)
    for cand in cands:
        if d_out % cand == 0 and d_out // cand >= 2:
            if 2 * nproj * d_in * cand * itemsize <= budget:
                return cand
    for cand in reversed(cands):
        if d_out % cand == 0 and d_out // cand >= 2:
            return cand
    return d_out


def _ff_tile(d_ff):
    """d_ff reduction slab (smaller on v7x so w1/w2 slabs fit 64 MiB VMEM)."""
    prefs = (512, 256) if _SMALL_VMEM else (1024, 512)
    for cand in prefs:
        if d_ff % cand == 0 and d_ff // cand >= 2:
            return cand
    return d_ff


def _seq_tile(s):
    """Sequence tile for the attention grid (multiple of 128, or full extent)."""
    prefs = (256, 128) if _SMALL_VMEM else (512, 256, 128)
    for cand in prefs:
        if s % cand == 0 and s // cand >= 2:
            return cand
    return s


def _head_tile(num_heads, dk):
    """Heads per attention grid step.  The q/k/v/out column block is hg*dk lanes wide
    and must be a multiple of 128 lanes (or the full d_model)."""
    best = None
    for hg in range(1, num_heads + 1):
        if num_heads % hg == 0 and (hg * dk) % 128 == 0:
            best = hg
            if hg * dk >= 256:
                break
    return best if best is not None else num_heads


# --------------------- fused LayerNorm -> projection(s) -> +residual ---------------------

def _proj_kernel(*refs, nproj, apply_ln, has_residual, eps, feat):
    x_ref, alpha_ref, beta_ref = refs[:3]
    w_refs = refs[3:3 + nproj]
    b_refs = refs[3 + nproj:3 + 2 * nproj]
    pos = 3 + 2 * nproj
    res_ref = refs[pos] if has_residual else None
    o_refs = refs[pos + (1 if has_residual else 0):]

    x = x_ref[...]
    if apply_ln:
        # torch LayerNormalization: unbiased std (n-1), eps added to std, scalar affine.
        xf = x.astype(jnp.float32)
        mean = jnp.mean(xf, axis=-1, keepdims=True)
        diff = xf - mean
        var = jnp.sum(diff * diff, axis=-1, keepdims=True) * (1.0 / (feat - 1))
        inv = pl.reciprocal(jnp.sqrt(var) + eps)          # reciprocal-multiply (EUP)
        h = alpha_ref[...] * diff * inv + beta_ref[...]
    else:
        h = x
    h = h.astype(w_refs[0].dtype)                         # bf16 weights -> bf16 MXU path

    for w_ref, b_ref, o_ref in zip(w_refs, b_refs, o_refs):
        y = jnp.dot(h, w_ref[...], preferred_element_type=jnp.float32)
        y = y + b_ref[...].astype(jnp.float32)
        if has_residual:
            y = y + res_ref[...].astype(jnp.float32)      # residual-add epilogue
        o_ref[...] = y.astype(o_ref.dtype)


def fused_proj(x2d, weights, biases, *, ln=None, residual=None, eps=1e-6):
    """Row-tiled fused kernel: [optional LayerNorm] -> one or more x@W+b projections
    sharing the single read of x -> [optional residual add].  Weights are streamed in
    (d_in, tile_out) slabs; all grid axes are 'parallel' (megacore-shardable)."""
    n, d_in = x2d.shape
    nproj = len(weights)
    d_out = weights[0].shape[1]
    assert all(w.shape == (d_in, d_out) for w in weights)

    tile_n = _row_tile(n)
    tile_o = _col_tile(d_out, d_in, nproj, jnp.dtype(weights[0].dtype).itemsize)
    apply_ln = ln is not None
    has_res = residual is not None
    alpha = ln["alpha"] if apply_ln else jnp.ones((1, d_in), jnp.float32)
    beta = ln["bias"] if apply_ln else jnp.zeros((1, d_in), jnp.float32)

    x_spec = pl.BlockSpec((tile_n, d_in), lambda i, j: (i, 0))
    ln_spec = pl.BlockSpec((1, d_in), lambda i, j: (0, 0))
    w_spec = pl.BlockSpec((d_in, tile_o), lambda i, j: (0, j))
    b_spec = pl.BlockSpec((1, tile_o), lambda i, j: (0, j))
    o_spec = pl.BlockSpec((tile_n, tile_o), lambda i, j: (i, j))

    in_specs = [x_spec, ln_spec, ln_spec] + [w_spec] * nproj + [b_spec] * nproj
    args = [x2d, alpha, beta, *weights, *biases]
    if has_res:
        in_specs.append(o_spec)
        args.append(residual)

    out = pl.pallas_call(
        functools.partial(_proj_kernel, nproj=nproj, apply_ln=apply_ln,
                          has_residual=has_res, eps=eps, feat=d_in),
        out_shape=tuple(jax.ShapeDtypeStruct((n, d_out), x2d.dtype)
                        for _ in range(nproj)),
        grid_spec=pltpu.PrefetchScalarGridSpec(
            num_scalar_prefetch=0,
            grid=(n // tile_n, d_out // tile_o),
            in_specs=in_specs,
            out_specs=[o_spec] * nproj,
        ),
        compiler_params=_compiler_params(("parallel", "parallel")),
    )(*args)
    return out if nproj > 1 else out[0]


# ----------------------------- flash-style attention core -----------------------------

def _attention_kernel(q_ref, k_ref, v_ref, mask_ref, o_ref, m_sc, l_sc, acc_sc,
                      *, scale, hg, dk):
    kk = pl.program_id(3)                              # streamed Sk axis (last, arbitrary)

    @pl.when(kk == 0)
    def _init():
        m_sc[...] = jnp.full_like(m_sc, -jnp.inf)
        l_sc[...] = jnp.zeros_like(l_sc)
        acc_sc[...] = jnp.zeros_like(acc_sc)

    keep = mask_ref[...] != 0                          # (1|tq, tk); broadcast in-kernel

    for h in range(hg):                                # static unroll over the head group
        c0, c1 = h * dk, (h + 1) * dk
        q = q_ref[:, c0:c1]                            # (tq, dk)
        kmat = k_ref[:, c0:c1]                         # (tk, dk)
        s = jax.lax.dot_general(q, kmat, (((1,), (1,)), ((), ())),
                                preferred_element_type=jnp.float32) * scale
        s = jnp.where(keep, s, -1e9)                   # masked_fill(mask == 0, -1e9)

        m_prev = m_sc[:, h:h + 1]                      # (tq, 1)
        m_new = jnp.maximum(m_prev, jnp.max(s, axis=-1, keepdims=True))
        alpha = jnp.exp(m_prev - m_new)
        p = jnp.exp(s - m_new)
        l_sc[:, h:h + 1] = alpha * l_sc[:, h:h + 1] + jnp.sum(p, axis=-1, keepdims=True)
        pv = jnp.dot(p.astype(v_ref.dtype), v_ref[:, c0:c1],
                     preferred_element_type=jnp.float32)
        acc_sc[:, c0:c1] = alpha * acc_sc[:, c0:c1] + pv
        m_sc[:, h:h + 1] = m_new
        # TODO(synk): attention-score dropout (training mode) not implemented (eval).

    @pl.when(kk == pl.num_programs(3) - 1)
    def _finalize():
        for h in range(hg):
            c0, c1 = h * dk, (h + 1) * dk
            inv = pl.reciprocal(l_sc[:, h:h + 1])      # reciprocal-multiply softmax denom
            o_ref[:, c0:c1] = (acc_sc[:, c0:c1] * inv).astype(o_ref.dtype)


def _attention_core(q2d, k2d, v2d, mask3, *, B, Sq, Sk, num_heads):
    """q2d: (B*Sq, D); k2d/v2d: (B*Sk, D); mask3: (Bm, Sqm, Sk) int32 (compact).
    Output (B*Sq, D).  Batch/head/q-tile indexing is done purely via BlockSpec index
    maps on the flat row-major layout, so no HBM transposes are needed.
    Note: sequence lengths are assumed to be multiples of 8 (standard for TPU)."""
    H = num_heads
    D = q2d.shape[1]
    dk = D // H
    hg = _head_tile(H, dk)
    tq = _seq_tile(Sq)
    tk = _seq_tile(Sk)
    nqr, nkr, nhb = Sq // tq, Sk // tk, H // hg
    Bm, Sqm = mask3.shape[0], mask3.shape[1]
    sqb = tq if Sqm == Sq else 1
    scale = 1.0 / math.sqrt(dk)

    def q_map(b, h, qi, kki):
        return (b * nqr + qi, h)

    def kv_map(b, h, qi, kki):
        return (b * nkr + kki, h)

    def m_map(b, h, qi, kki):
        return (b if Bm > 1 else 0, qi if Sqm > 1 else 0, kki)

    return pl.pallas_call(
        functools.partial(_attention_kernel, scale=scale, hg=hg, dk=dk),
        out_shape=jax.ShapeDtypeStruct((B * Sq, D), q2d.dtype),
        grid_spec=pltpu.PrefetchScalarGridSpec(
            num_scalar_prefetch=0,
            grid=(B, nhb, nqr, nkr),
            in_specs=[
                pl.BlockSpec((tq, hg * dk), q_map),       # q rows/head-group columns
                pl.BlockSpec((tk, hg * dk), kv_map),      # k
                pl.BlockSpec((tk, hg * dk), kv_map),      # v
                pl.BlockSpec((None, sqb, tk), m_map),     # compact mask
            ],
            out_specs=pl.BlockSpec((tq, hg * dk), q_map),
            scratch_shapes=[pltpu.VMEM((tq, hg), jnp.float32),       # running max m
                            pltpu.VMEM((tq, hg), jnp.float32),       # running sum l
                            pltpu.VMEM((tq, hg * dk), jnp.float32)], # f32 accumulator
        ),
        compiler_params=_compiler_params(
            ("parallel", "parallel", "parallel", "arbitrary")),
    )(q2d, k2d, v2d, mask3)


# ------------------------- fused LN -> FFN -> +residual kernel -------------------------

def _ffn_kernel(x_ref, alpha_ref, beta_ref, w1_ref, b1_ref, w2_ref, b2_ref,
                o_ref, h_ref, acc_ref, *, eps, feat):
    k = pl.program_id(1)                               # d_ff reduction axis (last)

    @pl.when(k == 0)
    def _prologue():
        xf = x_ref[...].astype(jnp.float32)
        mean = jnp.mean(xf, axis=-1, keepdims=True)
        diff = xf - mean
        var = jnp.sum(diff * diff, axis=-1, keepdims=True) * (1.0 / (feat - 1))
        inv = pl.reciprocal(jnp.sqrt(var) + eps)
        h_ref[...] = (alpha_ref[...] * diff * inv + beta_ref[...]).astype(h_ref.dtype)
        acc_ref[...] = jnp.zeros_like(acc_ref)

    t = jnp.dot(h_ref[...], w1_ref[...], preferred_element_type=jnp.float32)
    t = jnp.maximum(t + b1_ref[...].astype(jnp.float32), 0.0)     # linear1 + ReLU slab
    # TODO(synk): training-mode dropout (pltpu.prng_random_bits) not implemented (eval).
    acc_ref[...] += jnp.dot(t.astype(w2_ref.dtype), w2_ref[...],
                            preferred_element_type=jnp.float32)

    @pl.when(k == pl.num_programs(1) - 1)
    def _epilogue():
        y = acc_ref[...] + b2_ref[...].astype(jnp.float32) + x_ref[...].astype(jnp.float32)
        o_ref[...] = y.astype(o_ref.dtype)             # residual-add epilogue


def fused_ffn(x2d, ln, w1, b1, w2, b2, *, eps=1e-6):
    """x + linear2(relu(linear1(LN(x)))) with d_ff streamed as a reduction axis so the
    (tile_n, d_ff) intermediate and the w1/w2 slabs stay bounded in VMEM."""
    n, d_model = x2d.shape
    d_ff = w1.shape[1]
    tile_n = _row_tile(n)
    tile_ff = _ff_tile(d_ff)
    return pl.pallas_call(
        functools.partial(_ffn_kernel, eps=eps, feat=d_model),
        out_shape=jax.ShapeDtypeStruct((n, d_model), x2d.dtype),
        grid_spec=pltpu.PrefetchScalarGridSpec(
            num_scalar_prefetch=0,
            grid=(n // tile_n, d_ff // tile_ff),
            in_specs=[
                pl.BlockSpec((tile_n, d_model), lambda i, k: (i, 0)),   # x (LN + residual)
                pl.BlockSpec((1, d_model), lambda i, k: (0, 0)),        # ln alpha
                pl.BlockSpec((1, d_model), lambda i, k: (0, 0)),        # ln bias
                pl.BlockSpec((d_model, tile_ff), lambda i, k: (0, k)),  # w1 slab
                pl.BlockSpec((1, tile_ff), lambda i, k: (0, k)),        # b1 slab
                pl.BlockSpec((tile_ff, d_model), lambda i, k: (k, 0)),  # w2 slab
                pl.BlockSpec((1, d_model), lambda i, k: (0, 0)),        # b2 (resident)
            ],
            out_specs=pl.BlockSpec((tile_n, d_model), lambda i, k: (i, 0)),
            scratch_shapes=[pltpu.VMEM((tile_n, d_model), w1.dtype),    # LN(x) cache
                            pltpu.VMEM((tile_n, d_model), jnp.float32)],
        ),
        compiler_params=_compiler_params(("parallel", "arbitrary")),
    )(x2d, ln["alpha"], ln["bias"], w1, b1, w2, b2)


# ------------------------------------ decoder block ------------------------------------

def _canon_mask(mask):
    """(Sq,Sk) / (B,1,Sk) / (B,Sq,Sk) / (B,1,Sq,Sk) -> compact (Bm, Sqm, Sk) int32;
    the broadcast over batch / heads / query rows happens inside the kernel."""
    m = jnp.asarray(mask)
    if m.ndim == 4:
        m = m[:, 0]
    if m.ndim == 2:
        m = m[None]
    return (m != 0).astype(jnp.int32)


def _self_attention(x2d, mask3, ln, p, *, B, S, num_heads, eps):
    # One fused call for Q/K/V: x is read (and layer-normalized) exactly once.
    q, k, v = fused_proj(x2d, [p["wq"], p["wk"], p["wv"]],
                         [p["bq"], p["bk"], p["bv"]], ln=ln, eps=eps)
    attn = _attention_core(q, k, v, mask3, B=B, Sq=S, Sk=S, num_heads=num_heads)
    return fused_proj(attn, [p["wo"]], [p["bo"]], residual=x2d)


def _cross_attention(x2d, enc2d, mask3, ln, p, *, B, Sq, Sk, num_heads, eps):
    q = fused_proj(x2d, [p["wq"]], [p["bq"]], ln=ln, eps=eps)     # LN only on the query
    k, v = fused_proj(enc2d, [p["wk"], p["wv"]], [p["bk"], p["bv"]])
    attn = _attention_core(q, k, v, mask3, B=B, Sq=Sq, Sk=Sk, num_heads=num_heads)
    return fused_proj(attn, [p["wo"]], [p["bo"]], residual=x2d)


def decoder_block(x, enc_out, src_mask, tgt_mask, params, num_heads, eps=1e-6):
    """DecoderBlock.forward with pre-norm residual connections (eval-mode dropout)."""
    B, Sq, D = x.shape
    Sk = enc_out.shape[1]
    x2d = x.reshape(B * Sq, D)
    enc2d = enc_out.reshape(B * Sk, D)
    tgt_m = _canon_mask(tgt_mask)
    src_m = _canon_mask(src_mask)

    # residual 0: masked self-attention (LN + QKV fused, residual fused into O-proj)
    x2d = _self_attention(x2d, tgt_m, params["ln0"], params["self_attn"],
                          B=B, S=Sq, num_heads=num_heads, eps=eps)
    # residual 1: cross-attention (K/V from encoder output, no LN on encoder output)
    x2d = _cross_attention(x2d, enc2d, src_m, params["ln1"], params["cross_attn"],
                           B=B, Sq=Sq, Sk=Sk, num_heads=num_heads, eps=eps)
    # residual 2: feed-forward (LN + FFN + residual fused)
    f = params["ffn"]
    x2d = fused_ffn(x2d, params["ln2"], f["w1"], f["b1"], f["w2"], f["b2"], eps=eps)
    return x2d.reshape(B, Sq, D)


# -------------------------------------- parameters --------------------------------------

def _linear_init(key, d_in, d_out, dtype):
    k1, k2 = jax.random.split(key)
    bound = 1.0 / math.sqrt(d_in)
    w = jax.random.uniform(k1, (d_in, d_out), dtype, -bound, bound)  # (in, out) layout
    b = jax.random.uniform(k2, (1, d_out), dtype, -bound, bound)
    return w, b


def init_decoder_params(key, d_model, d_ff, dtype=jnp.float32):
    """nn.Linear-style init; LayerNormalization alpha=1, bias=0 (scalar, broadcast to a
    lane-dense row).  For production use dtype=jnp.bfloat16 (kernels keep f32 accum)."""
    k_self, k_cross, k_w1, k_w2 = jax.random.split(key, 4)

    def attn(k):
        kq, kk, kv, ko = jax.random.split(k, 4)
        wq, bq = _linear_init(kq, d_model, d_model, dtype)
        wk, bk = _linear_init(kk, d_model, d_model, dtype)
        wv, bv = _linear_init(kv, d_model, d_model, dtype)
        wo, bo = _linear_init(ko, d_model, d_model, dtype)
        return dict(wq=wq, bq=bq, wk=wk, bk=bk, wv=wv, bv=bv, wo=wo, bo=bo)

    def ln():
        return dict(alpha=jnp.ones((1, d_model), jnp.float32),
                    bias=jnp.zeros((1, d_model), jnp.float32))

    w1, b1 = _linear_init(k_w1, d_model, d_ff, dtype)
    w2, b2 = _linear_init(k_w2, d_ff, d_model, dtype)
    return dict(self_attn=attn(k_self), cross_attn=attn(k_cross),
                ffn=dict(w1=w1, b1=b1, w2=w2, b2=b2),
                ln0=ln(), ln1=ln(), ln2=ln())


# ----------------------------------- pure-JAX reference -----------------------------------

def _ln_ref(x, alpha_row, bias_row, eps):
    mean = jnp.mean(x, axis=-1, keepdims=True)
    std = jnp.std(x, axis=-1, keepdims=True, ddof=1)
    return alpha_row * (x - mean) / (std + eps) + bias_row


def _mha_ref(q_in, kv_in, mask, p, num_heads):
    B, Sq, D = q_in.shape
    Sk = kv_in.shape[1]
    dk = D // num_heads
    q = (q_in @ p["wq"] + p["bq"]).reshape(B, Sq, num_heads, dk).transpose(0, 2, 1, 3)
    k = (kv_in @ p["wk"] + p["bk"]).reshape(B, Sk, num_heads, dk).transpose(0, 2, 1, 3)
    v = (kv_in @ p["wv"] + p["bv"]).reshape(B, Sk, num_heads, dk).transpose(0, 2, 1, 3)
    s = jnp.einsum("bhqd,bhkd->bhqk", q, k) / math.sqrt(dk)
    m = jnp.asarray(mask)
    if m.ndim == 4:
        m = m[:, 0]
    if m.ndim == 2:
        m = m[None]
    m = jnp.broadcast_to(m, (B, Sq, Sk))[:, None, :, :]
    s = jnp.where(m == 0, -1e9, s)
    a = jax.nn.softmax(s, axis=-1)
    o = jnp.einsum("bhqk,bhkd->bhqd", a, v).transpose(0, 2, 1, 3).reshape(B, Sq, D)
    return o @ p["wo"] + p["bo"]


def _ffn_ref(x, ffn):
    h = jnp.maximum(x @ ffn["w1"] + ffn["b1"], 0.0)
    return h @ ffn["w2"] + ffn["b2"]


def decoder_block_ref(x, enc, src_mask, tgt_mask, params, num_heads, eps=1e-6):
    h = _ln_ref(x, params["ln0"]["alpha"], params["ln0"]["bias"], eps)
    x = x + _mha_ref(h, h, tgt_mask, params["self_attn"], num_heads)
    h = _ln_ref(x, params["ln1"]["alpha"], params["ln1"]["bias"], eps)
    x = x + _mha_ref(h, enc, src_mask, params["cross_attn"], num_heads)
    h = _ln_ref(x, params["ln2"]["alpha"], params["ln2"]["bias"], eps)
    x = x + _ffn_ref(h, params["ffn"])
    return x


# ------------------------------------------ main ------------------------------------------

if __name__ == "__main__":
    B, S_tgt, S_src = 2, 8, 8
    d_model, num_heads, d_ff = 32, 4, 64

    key = jax.random.PRNGKey(0)
    kx, ke, kp = jax.random.split(key, 3)

    x = jax.random.normal(kx, (B, S_tgt, d_model), jnp.float32)
    enc_out = jax.random.normal(ke, (B, S_src, d_model), jnp.float32)
    params = init_decoder_params(kp, d_model, d_ff)

    tgt_mask = jnp.tril(jnp.ones((S_tgt, S_tgt), jnp.float32))   # causal mask
    src_mask = jnp.ones((B, 1, S_src), jnp.float32)              # no source padding

    out = decoder_block(x, enc_out, src_mask, tgt_mask, params, num_heads)
    out = jax.block_until_ready(out)

    ref = decoder_block_ref(x, enc_out, src_mask, tgt_mask, params, num_heads)
    assert out.shape == (B, S_tgt, d_model)
    err = float(jnp.max(jnp.abs(out - ref)))
    assert jnp.allclose(out, ref, atol=2e-3, rtol=2e-3), err

    print("KERNEL_OK")
</pallas_src>

<mosaic_0001>
module attributes {stable_mosaic.version = 11 : i64} {
  func.func @_proj_kernel(%arg0: i32, %arg1: i32, %arg2: memref<16x32xf32, #tpu.memory_space<vmem>>, %arg3: memref<1x32xf32, #tpu.memory_space<vmem>>, %arg4: memref<1x32xf32, #tpu.memory_space<vmem>>, %arg5: memref<32x32xf32, #tpu.memory_space<vmem>>, %arg6: memref<32x32xf32, #tpu.memory_space<vmem>>, %arg7: memref<32x32xf32, #tpu.memory_space<vmem>>, %arg8: memref<1x32xf32, #tpu.memory_space<vmem>>, %arg9: memref<1x32xf32, #tpu.memory_space<vmem>>, %arg10: memref<1x32xf32, #tpu.memory_space<vmem>>, %arg11: memref<16x32xf32, #tpu.memory_space<vmem>>, %arg12: memref<16x32xf32, #tpu.memory_space<vmem>>, %arg13: memref<16x32xf32, #tpu.memory_space<vmem>>) attributes {dimension_semantics = [#tpu.dimension_semantics<parallel>, #tpu.dimension_semantics<parallel>], iteration_bounds = array<i64: 1, 1>, scalar_prefetch = 0 : i64, scratch_operands = 0 : i64, tpu.core_type = #tpu.core_type<tc>, window_params = [{transform_indices = @transform_0, window_bounds = array<i64: 16, 32>}, {pipeline_mode = #tpu.pipeline_mode<synchronous>, transform_indices = @transform_1, window_bounds = array<i64: 1, 32>}, {pipeline_mode = #tpu.pipeline_mode<synchronous>, transform_indices = @transform_2, window_bounds = array<i64: 1, 32>}, {transform_indices = @transform_3, window_bounds = array<i64: 32, 32>}, {transform_indices = @transform_4, window_bounds = array<i64: 32, 32>}, {transform_indices = @transform_5, window_bounds = array<i64: 32, 32>}, {transform_indices = @transform_6, window_bounds = array<i64: 1, 32>}, {transform_indices = @transform_7, window_bounds = array<i64: 1, 32>}, {transform_indices = @transform_8, window_bounds = array<i64: 1, 32>}, {transform_indices = @transform_9, window_bounds = array<i64: 16, 32>}, {transform_indices = @transform_10, window_bounds = array<i64: 16, 32>}, {transform_indices = @transform_11, window_bounds = array<i64: 16, 32>}]} {
    %c0 = arith.constant 0 : index
    %c0_0 = arith.constant 0 : index
    %0 = vector.load %arg2[%c0, %c0_0] : memref<16x32xf32, #tpu.memory_space<vmem>>, vector<16x32xf32>
    %cst = arith.constant dense<0.000000e+00> : vector<16xf32>
    %1 = vector.multi_reduction <add>, %0, %cst [1] : vector<16x32xf32> to vector<16xf32>
    %2 = vector.shape_cast %1 : vector<16xf32> to vector<16x1xf32>
    %cst_1 = arith.constant 3.200000e+01 : f32
    %3 = vector.broadcast %cst_1 : f32 to vector<16x1xf32>
    %4 = arith.divf %2, %3 : vector<16x1xf32>
    %5 = vector.broadcast %4 : vector<16x1xf32> to vector<16x32xf32>
    %6 = arith.subf %0, %5 : vector<16x32xf32>
    %7 = arith.mulf %6, %6 : vector<16x32xf32>
    %cst_2 = arith.constant dense<0.000000e+00> : vector<16xf32>
    %8 = vector.multi_reduction <add>, %7, %cst_2 [1] : vector<16x32xf32> to vector<16xf32>
    %9 = vector.shape_cast %8 : vector<16xf32> to vector<16x1xf32>
    %cst_3 = arith.constant 0.0322580636 : f32
    %10 = vector.broadcast %cst_3 : f32 to vector<16x1xf32>
    %11 = arith.mulf %9, %10 : vector<16x1xf32>
    %12 = math.sqrt %11 : vector<16x1xf32>
    %cst_4 = arith.constant 9.99999997E-7 : f32
    %13 = vector.broadcast %cst_4 : f32 to vector<16x1xf32>
    %14 = arith.addf %12, %13 : vector<16x1xf32>
    %15 = tpu.reciprocal %14 : vector<16x1xf32> -> vector<16x1xf32>
    %c0_5 = arith.constant 0 : index
    %c0_6 = arith.constant 0 : index
    %16 = vector.load %arg3[%c0_5, %c0_6] : memref<1x32xf32, #tpu.memory_space<vmem>>, vector<1x32xf32>
    %17 = vector.broadcast %16 : vector<1x32xf32> to vector<16x32xf32>
    %18 = arith.mulf %17, %6 : vector<16x32xf32>
    %19 = vector.broadcast %15 : vector<16x1xf32> to vector<16x32xf32>
    %20 = arith.mulf %18, %19 : vector<16x32xf32>
    %c0_7 = arith.constant 0 : index
    %c0_8 = arith.constant 0 : index
    %21 = vector.load %arg4[%c0_7, %c0_8] : memref<1x32xf32, #tpu.memory_space<vmem>>, vector<1x32xf32>
    %22 = vector.broadcast %21 : vector<1x32xf32> to vector<16x32xf32>
    %23 = arith.addf %20, %22 : vector<16x32xf32>
    %c0_9 = arith.constant 0 : index
    %c0_10 = arith.constant 0 : index
    %24 = vector.load %arg5[%c0_9, %c0_10] : memref<32x32xf32, #tpu.memory_space<vmem>>, vector<32x32xf32>
    %cst_11 = arith.constant dense<0.000000e+00> : vector<16x32xf32>
    %25 = tpu.matmul %23, %24, %cst_11 {dimension_numbers = #tpu.dot_dimension_numbers<[1], [0], [0], [1], [0, 0, 1, 1], [], []>} : vector<16x32xf32>, vector<32x32xf32>, vector<16x32xf32> -> vector<16x32xf32>
    %c0_12 = arith.constant 0 : index
    %c0_13 = arith.constant 0 : index
    %26 = vector.load %arg8[%c0_12, %c0_13] : memref<1x32xf32, #tpu.memory_space<vmem>>, vector<1x32xf32>
    %27 = vector.broadcast %26 : vector<1x32xf32> to vector<16x32xf32>
    %28 = arith.addf %25, %27 : vector<16x32xf32>
    %c0_14 = arith.constant 0 : index
    %c0_15 = arith.constant 0 : index
    %29 = vector.load %arg11[%c0_14, %c0_15] : memref<16x32xf32, #tpu.memory_space<vmem>>, vector<16x32xf32>
    tpu.vector_store %arg11[%c0_14, %c0_15], %28 {strides = array<i32>} : memref<16x32xf32, #tpu.memory_space<vmem>>, vector<16x32xf32>,
    %c0_16 = arith.constant 0 : index
    %c0_17 = arith.constant 0 : index
    %30 = vector.load %arg6[%c0_16, %c0_17] : memref<32x32xf32, #tpu.memory_space<vmem>>, vector<32x32xf32>
    %cst_18 = arith.constant dense<0.000000e+00> : vector<16x32xf32>
    %31 = tpu.matmul %23, %30, %cst_18 {dimension_numbers = #tpu.dot_dimension_numbers<[1], [0], [0], [1], [0, 0, 1, 1], [], []>} : vector<16x32xf32>, vector<32x32xf32>, vector<16x32xf32> -> vector<16x32xf32>
    %c0_19 = arith.constant 0 : index
    %c0_20 = arith.constant 0 : index
    %32 = vector.load %arg9[%c0_19, %c0_20] : memref<1x32xf32, #tpu.memory_space<vmem>>, vector<1x32xf32>
    %33 = vector.broadcast %32 : vector<1x32xf32> to vector<16x32xf32>
    %34 = arith.addf %31, %33 : vector<16x32xf32>
    %c0_21 = arith.constant 0 : index
    %c0_22 = arith.constant 0 : index
    %35 = vector.load %arg12[%c0_21, %c0_22] : memref<16x32xf32, #tpu.memory_space<vmem>>, vector<16x32xf32>
    tpu.vector_store %arg12[%c0_21, %c0_22], %34 {strides = array<i32>} : memref<16x32xf32, #tpu.memory_space<vmem>>, vector<16x32xf32>,
    %c0_23 = arith.constant 0 : index
    %c0_24 = arith.constant 0 : index
    %36 = vector.load %arg7[%c0_23, %c0_24] : memref<32x32xf32, #tpu.memory_space<vmem>>, vector<32x32xf32>
    %cst_25 = arith.constant dense<0.000000e+00> : vector<16x32xf32>
    %37 = tpu.matmul %23, %36, %cst_25 {dimension_numbers = #tpu.dot_dimension_numbers<[1], [0], [0], [1], [0, 0, 1, 1], [], []>} : vector<16x32xf32>, vector<32x32xf32>, vector<16x32xf32> -> vector<16x32xf32>
    %c0_26 = arith.constant 0 : index
    %c0_27 = arith.constant 0 : index
    %38 = vector.load %arg10[%c0_26, %c0_27] : memref<1x32xf32, #tpu.memory_space<vmem>>, vector<1x32xf32>
    %39 = vector.broadcast %38 : vector<1x32xf32> to vector<16x32xf32>
    %40 = arith.addf %37, %39 : vector<16x32xf32>
    %c0_28 = arith.constant 0 : index
    %c0_29 = arith.constant 0 : index
    %41 = vector.load %arg13[%c0_28, %c0_29] : memref<16x32xf32, #tpu.memory_space<vmem>>, vector<16x32xf32>
    tpu.vector_store %arg13[%c0_28, %c0_29], %40 {strides = array<i32>} : memref<16x32xf32, #tpu.memory_space<vmem>>, vector<16x32xf32>,
    return
  }
  func.func @transform_0(%arg0: i32, %arg1: i32) -> (i32, i32) {
    %c0_i32 = arith.constant 0 : i32
    %c0_i32_0 = arith.constant 0 : i32
    return %arg0, %c0_i32 : i32, i32
  }
  func.func @transform_1(%arg0: i32, %arg1: i32) -> (i32, i32) {
    %c0_i32 = arith.constant 0 : i32
    %c0_i32_0 = arith.constant 0 : i32
    %c0_i32_1 = arith.constant 0 : i32
    return %c0_i32, %c0_i32_0 : i32, i32
  }
  func.func @transform_2(%arg0: i32, %arg1: i32) -> (i32, i32) {
    %c0_i32 = arith.constant 0 : i32
    %c0_i32_0 = arith.constant 0 : i32
    %c0_i32_1 = arith.constant 0 : i32
    return %c0_i32, %c0_i32_0 : i32, i32
  }
  func.func @transform_3(%arg0: i32, %arg1: i32) -> (i32, i32) {
    %c0_i32 = arith.constant 0 : i32
    %c0_i32_0 = arith.constant 0 : i32
    return %c0_i32, %arg1 : i32, i32
  }
  func.func @transform_4(%arg0: i32, %arg1: i32) -> (i32, i32) {
    %c0_i32 = arith.constant 0 : i32
    %c0_i32_0 = arith.constant 0 : i32
    return %c0_i32, %arg1 : i32, i32
  }
  func.func @transform_5(%arg0: i32, %arg1: i32) -> (i32, i32) {
    %c0_i32 = arith.constant 0 : i32
    %c0_i32_0 = arith.constant 0 : i32
    return %c0_i32, %arg1 : i32, i32
  }
  func.func @transform_6(%arg0: i32, %arg1: i32) -> (i32, i32) {
    %c0_i32 = arith.constant 0 : i32
    %c0_i32_0 = arith.constant 0 : i32
    return %c0_i32, %arg1 : i32, i32
  }
  func.func @transform_7(%arg0: i32, %arg1: i32) -> (i32, i32) {
    %c0_i32 = arith.constant 0 : i32
    %c0_i32_0 = arith.constant 0 : i32
    return %c0_i32, %arg1 : i32, i32
  }
  func.func @transform_8(%arg0: i32, %arg1: i32) -> (i32, i32) {
    %c0_i32 = arith.constant 0 : i32
    %c0_i32_0 = arith.constant 0 : i32
    return %c0_i32, %arg1 : i32, i32
  }
  func.func @transform_9(%arg0: i32, %arg1: i32) -> (i32, i32) {
    %c0_i32 = arith.constant 0 : i32
    return %arg0, %arg1 : i32, i32
  }
  func.func @transform_10(%arg0: i32, %arg1: i32) -> (i32, i32) {
    %c0_i32 = arith.constant 0 : i32
    return %arg0, %arg1 : i32, i32
  }
  func.func @transform_11(%arg0: i32, %arg1: i32) -> (i32, i32) {
    %c0_i32 = arith.constant 0 : i32
    return %arg0, %arg1 : i32, i32
  }
}

</mosaic_0001>

<llo_original>
// kernel: tpu_custom_call.1
$region0: #{tpu_custom_call.1}
  #allocation0 [shape = 'u32[]', space=smem, size = 0x4, offset = 0x4, fixed_abs, tag = 'smem constant byte address 0x4 - core index']
  #allocation1 [shape = 'u32[144,128]{1,0:T(1,128)}', space=vmem, size = 0x12000, scoped, tag = 'internal scratch']
  %s0 = inlined_call_operand.hbm [shape: f32[16,32], index: 0, kind: input, shape index: {}]
  %s1 = inlined_call_operand.hbm [shape: f32[1,32], index: 1, kind: input, shape index: {}]
  %s2 = inlined_call_operand.hbm [shape: f32[1,32], index: 2, kind: input, shape index: {}]
  %s3 = inlined_call_operand.hbm [shape: f32[32,32], index: 3, kind: input, shape index: {}]
  %s4 = inlined_call_operand.hbm [shape: f32[32,32], index: 4, kind: input, shape index: {}]
  %s5 = inlined_call_operand.hbm [shape: f32[32,32], index: 5, kind: input, shape index: {}]
  %s6 = inlined_call_operand.hbm [shape: f32[1,32], index: 6, kind: input, shape index: {}]
  %s7 = inlined_call_operand.hbm [shape: f32[1,32], index: 7, kind: input, shape index: {}]
  %s8 = inlined_call_operand.hbm [shape: f32[1,32], index: 8, kind: input, shape index: {}]
  %s9 = inlined_call_operand.hbm [shape: f32[16,32], index: 9, kind: output, shape index: {0}]
  %s10 = inlined_call_operand.hbm [shape: f32[16,32], index: 10, kind: output, shape index: {1}]
  %s11 = inlined_call_operand.hbm [shape: f32[16,32], index: 11, kind: output, shape index: {2}]
  %12 = xla_tuple %s9, %s10, %s11
  %s13 = sld [smem:[#allocation0]]
  $region98: #{tpu_custom_call.1} parent=0
    _
  %s15 = ssub.s32 1, %s13
  %s16 = scalar_select 0, %s15, %s13
  $region1: #{tpu_custom_call.1} parent=0
    #allocation2 [shape = 'u8[8192]{0}', space=vmem, size = 0x2000, scoped, tag = 'input window, operand 0, single buffered']
    #allocation3 [shape = 's32[1]{0}', space=sflag, size = 0x4, scoped, tag = 'scoped memory for tpu_custom_call.1']
    #allocation4 [shape = 's32[1]{0}', space=sflag, size = 0x4, scoped, tag = 'scoped memory for tpu_custom_call.1']
    #allocation5 [shape = 'u8[512]{0}', space=vmem, size = 0x400, scoped, tag = 'input window, operand 1, single buffered']
    #allocation6 [shape = 's32[1]{0}', space=sflag, size = 0x4, scoped, tag = 'scoped memory for tpu_custom_call.1']
    #allocation7 [shape = 'u8[512]{0}', space=vmem, size = 0x400, scoped, tag = 'input window, operand 2, single buffered']
    #allocation8 [shape = 'u8[16384]{0}', space=vmem, size = 0x4000, scoped, tag = 'input window, operand 3, single buffered']
    #allocation9 [shape = 's32[1]{0}', space=sflag, size = 0x4, scoped, tag = 'scoped memory for tpu_custom_call.1']
    #allocation10 [shape = 'u8[16384]{0}', space=vmem, size = 0x4000, scoped, tag = 'input window, operand 4, single buffered']
    #allocation11 [shape = 'u8[16384]{0}', space=vmem, size = 0x4000, scoped, tag = 'input window, operand 5, single buffered']
    #allocation12 [shape = 's32[1]{0}', space=sflag, size = 0x4, scoped, tag = 'scoped memory for tpu_custom_call.1']
    #allocation13 [shape = 'u8[512]{0}', space=vmem, size = 0x400, scoped, tag = 'input window, operand 6, single buffered']
    #allocation14 [shape = 'u8[512]{0}', space=vmem, size = 0x400, scoped, tag = 'input window, operand 7, single buffered']
    #allocation15 [shape = 's32[1]{0}', space=sflag, size = 0x4, scoped, tag = 'scoped memory for tpu_custom_call.1']
    #allocation16 [shape = 'u8[512]{0}', space=vmem, size = 0x400, scoped, tag = 'input window, operand 8, single buffered']
    #allocation17 [shape = 'u8[8192]{0}', space=vmem, size = 0x2000, scoped, tag = 'output window, operand 0, single buffered']
    #allocation18 [shape = 'u8[8192]{0}', space=vmem, size = 0x2000, scoped, tag = 'output window, operand 1, single buffered']
    #allocation19 [shape = 's32[1]{0}', space=sflag, size = 0x4, scoped, tag = 'scoped memory for tpu_custom_call.1']
    #allocation20 [shape = 'u8[8192]{0}', space=vmem, size = 0x2000, scoped, tag = 'output window, operand 2, single buffered']
    %17 = vsyncpa [#allocation3], 0
    %18 = vsyncpa [#allocation6], 0
    %19 = vsyncpa [#allocation9], 0
    %20 = vsyncpa [#allocation12], 0
    %21 = vsyncpa [#allocation15], 0
    %22 = vsyncpa [#allocation4], 0
    %23 = vsyncpa [#allocation19], 0
    // Predicated region
    $region2: #{tpu_custom_call.1} parent=1 // pred_check
      _
    $region3: #{tpu_custom_call.1} parent=1 // pred_check_branch
      %25 = sbr.rel (0) target = $region5
    $region4: #{tpu_custom_call.1} parent=1 // pred_region
      %s27 = ssub.s32 256, 256
      %28 = vsyncadd [#allocation3], %s27
      %s29 = sshll.u32 [#allocation2], 4
      %s30 = int_to_ptr.vmem [resolvable:$true] %s29
      %35 = dma.hbm_to_vmem [thread:$0]  %s0, 256, %s30, [#allocation3], 128, 128, 8
    $region5: #{tpu_custom_call.1} parent=1 // pred_fallthru
      _
    // Predicated region
    $region6: #{tpu_custom_call.1} parent=1 // pred_check
      _
    $region7: #{tpu_custom_call.1} parent=1 // pred_check_branch
      %37 = sbr.rel (0) target = $region9
    $region8: #{tpu_custom_call.1} parent=1 // pred_region
      %s39 = ssub.s32 16, 16
      %40 = vsyncadd [#allocation6], %s39
      %s42 = sshll.u32 [#allocation5], 4
      %s43 = int_to_ptr.vmem [resolvable:$true] %s42
      %45 = dma.hbm_to_vmem [thread:$0]  %s1, 16, %s43, [#allocation6]
    $region9: #{tpu_custom_call.1} parent=1 // pred_fallthru
      _
    // Predicated region
    $region10: #{tpu_custom_call.1} parent=1 // pred_check
      _
    $region11: #{tpu_custom_call.1} parent=1 // pred_check_branch
      %47 = sbr.rel (0) target = $region13
    $region12: #{tpu_custom_call.1} parent=1 // pred_region
      %s49 = ssub.s32 16, 16
      %50 = vsyncadd [#allocation6], %s49
      %s52 = sshll.u32 [#allocation7], 4
      %s53 = int_to_ptr.vmem [resolvable:$true] %s52
      %55 = dma.hbm_to_vmem [thread:$0]  %s2, 16, %s53, [#allocation6]
    $region13: #{tpu_custom_call.1} parent=1 // pred_fallthru
      _
    // Predicated region
    $region14: #{tpu_custom_call.1} parent=1 // pred_check
      _
    $region15: #{tpu_custom_call.1} parent=1 // pred_check_branch
      %57 = sbr.rel (0) target = $region17
    $region16: #{tpu_custom_call.1} parent=1 // pred_region
      %s59 = ssub.s32 512, 512
      %60 = vsyncadd [#allocation9], %s59
      %s61 = sshll.u32 [#allocation8], 4
      %s62 = int_to_ptr.vmem [resolvable:$true] %s61
      %67 = dma.hbm_to_vmem [thread:$0]  %s3, 512, %s62, [#allocation9], 128, 128, 8
    $region17: #{tpu_custom_call.1} parent=1 // pred_fallthru
      _
    // Predicated region
    $region18: #{tpu_custom_call.1} parent=1 // pred_check
      _
    $region19: #{tpu_custom_call.1} parent=1 // pred_check_branch
      %69 = sbr.rel (0) target = $region21
    $region20: #{tpu_custom_call.1} parent=1 // pred_region
      %s71 = ssub.s32 512, 512
      %72 = vsyncadd [#allocation9], %s71
      %s73 = sshll.u32 [#allocation10], 4
      %s74 = int_to_ptr.vmem [resolvable:$true] %s73
      %79 = dma.hbm_to_vmem [thread:$0]  %s4, 512, %s74, [#allocation9], 128, 128, 8
    $region21: #{tpu_custom_call.1} parent=1 // pred_fallthru
      _
    // Predicated region
    $region22: #{tpu_custom_call.1} parent=1 // pred_check
      _
    $region23: #{tpu_custom_call.1} parent=1 // pred_check_branch
      %81 = sbr.rel (0) target = $region25
    $region24: #{tpu_custom_call.1} parent=1 // pred_region
      %s83 = ssub.s32 512, 512
      %84 = vsyncadd [#allocation12], %s83
      %s85 = sshll.u32 [#allocation11], 4
      %s86 = int_to_ptr.vmem [resolvable:$true] %s85
      %91 = dma.hbm_to_vmem [thread:$0]  %s5, 512, %s86, [#allocation12], 128, 128, 8
    $region25: #{tpu_custom_call.1} parent=1 // pred_fallthru
      _
    // Predicated region
    $region26: #{tpu_custom_call.1} parent=1 // pred_check
      _
    $region27: #{tpu_custom_call.1} parent=1 // pred_check_branch
      %93 = sbr.rel (0) target = $region29
    $region28: #{tpu_custom_call.1} parent=1 // pred_region
      %s95 = ssub.s32 16, 16
      %96 = vsyncadd [#allocation12], %s95
      %s98 = sshll.u32 [#allocation13], 4
      %s99 = int_to_ptr.vmem [resolvable:$true] %s98
      %101 = dma.hbm_to_vmem [thread:$0]  %s6, 16, %s99, [#allocation12]
    $region29: #{tpu_custom_call.1} parent=1 // pred_fallthru
      _
    // Predicated region
    $region30: #{tpu_custom_call.1} parent=1 // pred_check
      _
    $region31: #{tpu_custom_call.1} parent=1 // pred_check_branch
      %103 = sbr.rel (0) target = $region33
    $region32: #{tpu_custom_call.1} parent=1 // pred_region
      %s105 = ssub.s32 16, 16
      %106 = vsyncadd [#allocation15], %s105
      %s108 = sshll.u32 [#allocation14], 4
      %s109 = int_to_ptr.vmem [resolvable:$true] %s108
      %111 = dma.hbm_to_vmem [thread:$0]  %s7, 16, %s109, [#allocation15]
    $region33: #{tpu_custom_call.1} parent=1 // pred_fallthru
      _
    // Predicated region
    $region34: #{tpu_custom_call.1} parent=1 // pred_check
      _
    $region35: #{tpu_custom_call.1} parent=1 // pred_check_branch
      %113 = sbr.rel (0) target = $region37
    $region36: #{tpu_custom_call.1} parent=1 // pred_region
      %s115 = ssub.s32 16, 16
      %116 = vsyncadd [#allocation15], %s115
      %s118 = sshll.u32 [#allocation16], 4
      %s119 = int_to_ptr.vmem [resolvable:$true] %s118
      %121 = dma.hbm_to_vmem [thread:$0]  %s8, 16, %s119, [#allocation15]
    $region37: #{tpu_custom_call.1} parent=1 // pred_fallthru
      _
    // Predicated region
    $region38: #{tpu_custom_call.1} parent=1 // pred_check
      _
    $region39: #{tpu_custom_call.1} parent=1 // pred_check_branch
      %123 = sbr.rel (0) target = $region41
    $region40: #{tpu_custom_call.1} parent=1 // pred_region
      %124 = dma.done [#allocation3], 256
    $region41: #{tpu_custom_call.1} parent=1 // pred_fallthru
      _
    // Predicated region
    $region42: #{tpu_custom_call.1} parent=1 // pred_check
      _
    $region43: #{tpu_custom_call.1} parent=1 // pred_check_branch
      %126 = sbr.rel (0) target = $region45
    $region44: #{tpu_custom_call.1} parent=1 // pred_region
      %127 = dma.done [#allocation6], 16
    $region45: #{tpu_custom_call.1} parent=1 // pred_fallthru
      _
    // Predicated region
    $region46: #{tpu_custom_call.1} parent=1 // pred_check
      _
    $region47: #{tpu_custom_call.1} parent=1 // pred_check_branch
      %129 = sbr.rel (0) target = $region49
    $region48: #{tpu_custom_call.1} parent=1 // pred_region
      %130 = dma.done [#allocation6], 16
    $region49: #{tpu_custom_call.1} parent=1 // pred_fallthru
      _
    // Predicated region
    $region50: #{tpu_custom_call.1} parent=1 // pred_check
      _
    $region51: #{tpu_custom_call.1} parent=1 // pred_check_branch
      %132 = sbr.rel (0) target = $region53
    $region52: #{tpu_custom_call.1} parent=1 // pred_region
      %133 = dma.done [#allocation9], 512
    $region53: #{tpu_custom_call.1} parent=1 // pred_fallthru
      _
    // Predicated region
    $region54: #{tpu_custom_call.1} parent=1 // pred_check
      _
    $region55: #{tpu_custom_call.1} parent=1 // pred_check_branch
      %135 = sbr.rel (0) target = $region57
    $region56: #{tpu_custom_call.1} parent=1 // pred_region
      %136 = dma.done [#allocation9], 512
    $region57: #{tpu_custom_call.1} parent=1 // pred_fallthru
      _
    // Predicated region
    $region58: #{tpu_custom_call.1} parent=1 // pred_check
      _
    $region59: #{tpu_custom_call.1} parent=1 // pred_check_branch
      %138 = sbr.rel (0) target = $region61
    $region60: #{tpu_custom_call.1} parent=1 // pred_region
      %139 = dma.done [#allocation12], 512
    $region61: #{tpu_custom_call.1} parent=1 // pred_fallthru
      _
    // Predicated region
    $region62: #{tpu_custom_call.1} parent=1 // pred_check
      _
    $region63: #{tpu_custom_call.1} parent=1 // pred_check_branch
      %141 = sbr.rel (0) target = $region65
    $region64: #{tpu_custom_call.1} parent=1 // pred_region
      %142 = dma.done [#allocation12], 16
    $region65: #{tpu_custom_call.1} parent=1 // pred_fallthru
      _
    // Predicated region
    $region66: #{tpu_custom_call.1} parent=1 // pred_check
      _
    $region67: #{tpu_custom_call.1} parent=1 // pred_check_branch
      %144 = sbr.rel (0) target = $region69
    $region68: #{tpu_custom_call.1} parent=1 // pred_region
      %145 = dma.done [#allocation15], 16
    $region69: #{tpu_custom_call.1} parent=1 // pred_fallthru
      _
    // Predicated region
    $region70: #{tpu_custom_call.1} parent=1 // pred_check
      _
    $region71: #{tpu_custom_call.1} parent=1 // pred_check_branch
      %147 = sbr.rel (0) target = $region73
    $region72: #{tpu_custom_call.1} parent=1 // pred_region
      %148 = dma.done [#allocation15], 16
    $region73: #{tpu_custom_call.1} parent=1 // pred_fallthru
      _
    %v149 = vld [vmem:[#allocation2] sm:$0xff]
    %v150 = vld [vmem:[#allocation2 + $0x8] sm:$0xff]
    %vm151 = vcmask 261120
    %v152 = vsel %vm151, %v149, 0.0
    %153 = vadd.xlane.f32.xlu0 %v152
    %v154 = vpop.xlane.xlu0 %153
    %v155 = vsel %vm151, %v150, 0.0
    %156 = vadd.xlane.f32.xlu0 %v155
    %v157 = vpop.xlane.xlu0 %156
    %v158 = vrcp.pop 32.0
    %v159 = vmul.f32 %v154, %v158
    %v160 = vmul.f32 %v157, %v158
    %v161 = vsub.f32 %v149, %v159
    %v162 = vsub.f32 %v150, %v160
    %v163 = vmul.f32 %v161, %v161
    %v164 = vmul.f32 %v162, %v162
    %v165 = vsel %vm151, %v163, 0.0
    %166 = vadd.xlane.f32.xlu0 %v165
    %v167 = vpop.xlane.xlu0 %166
    %v168 = vsel %vm151, %v164, 0.0
    %169 = vadd.xlane.f32.xlu0 %v168
    %v170 = vpop.xlane.xlu0 %169
    %v171 = vmul.f32 %v167, 0.032258064
    %v172 = vmul.f32 %v170, 0.032258064
    %v173 = vrsqrt.pop %v171
    %v174 = vmul.f32 %v171, %v173
    %vm175 = vcmp.eq.f32.partialorder %v171, inf
    %v176 = vsel %vm175, %v171, %v174
    %vm177 = vcmp.eq.f32.partialorder %v171, 0.0
    %v178 = vand.u32 %v171, 2147483648
    %v179 = vsel %vm177, %v178, %v176
    %v180 = vrsqrt.pop %v172
    %v181 = vmul.f32 %v172, %v180
    %vm182 = vcmp.eq.f32.partialorder %v172, inf
    %v183 = vsel %vm182, %v172, %v181
    %vm184 = vcmp.eq.f32.partialorder %v172, 0.0
    %v185 = vand.u32 %v172, 2147483648
    %v186 = vsel %vm184, %v185, %v183
    %v187 = vadd.f32 %v179, 1e-06
    %v188 = vadd.f32 %v186, 1e-06
    %v189 = vrcp.pop %v187
    %v190 = vrcp.pop %v188
    %v191 = vld [vmem:[#allocation5] sm:$0x1]
    %v193 = vlaneseq
    %v194 = vshrl.u32 %v193, 7
    %v195 = vsub.s32 0, %v194
    %v196 = vrot.slane %v191, %v195
    %v198 = vmul.f32 %v196, %v161
    %v199 = vmul.f32 %v196, %v162
    %v200 = vmul.f32 %v198, %v189
    %v201 = vmul.f32 %v199, %v190
    %v202 = vld [vmem:[#allocation7] sm:$0x1]
    %v204 = vlaneseq
    %v205 = vshrl.u32 %v204, 7
    %v206 = vsub.s32 0, %v205
    %v207 = vrot.slane %v202, %v206
    %v209 = vadd.f32 %v200, %v207
    %v210 = vadd.f32 %v201, %v207
    %v211 = vld [vmem:[#allocation8] sm:$0xff]
    %v212 = vld [vmem:[#allocation8 + $0x8] sm:$0xff]
    %v213 = vld [vmem:[#allocation8 + $0x10] sm:$0xff]
    %v214 = vld [vmem:[#allocation8 + $0x18] sm:$0xff]
    %v215 = vld [vmem:[#allocation13] sm:$0x1]
    %v217 = vlaneseq
    %v218 = vshrl.u32 %v217, 7
    %v219 = vsub.s32 0, %v218
    %v220 = vrot.slane %v215, %v219
    %v223 = vsel %vm151, %v209, 0
    %v226 = vsel %vm151, %v210, 0
    %228 = vmatprep.subr.mxu0 0.0
    %229 = vmatpush1.msra.mxu0 %v211
    %230 = vmatprep.subr.mxu0 0.0
    %231 = vmatpush1.msra.mxu0 %v212
    %232 = vmatprep.subr.mxu0 0.0
    %233 = vmatpush1.msra.mxu0 %v213
    %234 = vmatprep.subr.mxu0 0.0
    %235 = vmatpush1.msra.mxu0 %v214
    %236 = vmatprep.subr.mxu0 0.0
    %237 = vmatpush1.msra.mxu0 0.0
    %238 = vmatprep.subr.mxu0 0.0
    %239 = vmatpush1.msra.mxu0 0.0
    %240 = vmatprep.subr.mxu0 0.0
    %241 = vmatpush1.msra.mxu0 0.0
    %242 = vmatprep.subr.mxu0 0.0
    %243 = vmatpush1.msra.mxu0 0.0
    %244 = vmatprep.subr.mxu0 0.0
    %245 = vmatpush1.msra.mxu0 0.0
    %246 = vmatprep.subr.mxu0 0.0
    %247 = vmatpush1.msra.mxu0 0.0
    %248 = vmatprep.subr.mxu0 0.0
    %249 = vmatpush1.msra.mxu0 0.0
    %250 = vmatprep.subr.mxu0 0.0
    %251 = vmatpush1.msra.mxu0 0.0
    %252 = vmatprep.subr.mxu0 0.0
    %253 = vmatpush1.msra.mxu0 0.0
    %254 = vmatprep.subr.mxu0 0.0
    %255 = vmatpush1.msra.mxu0 0.0
    %256 = vmatprep.subr.mxu0 0.0
    %257 = vmatpush1.msra.mxu0 0.0
    %258 = vmatprep.subr.mxu0 0.0
    %259 = vmatpush1.msra.mxu0 0.0
    %260 = vmatprep.subr.mxu0 0.0
    %261 = vmatpush1.msra.mxu0 0.0
    %262 = vmatprep.subr.mxu0 0.0
    %263 = vmatpush1.msra.mxu0 0.0
    %264 = vmatprep.subr.mxu0 0.0
    %265 = vmatpush1.msra.mxu0 0.0
    %266 = vmatprep.subr.mxu0 0.0
    %267 = vmatpush1.msra.mxu0 0.0
    %268 = vmatprep.subr.mxu0 0.0
    %269 = vmatpush1.msra.mxu0 0.0
    %270 = vmatprep.subr.mxu0 0.0
    %271 = vmatpush1.msra.mxu0 0.0
    %272 = vmatprep.subr.mxu0 0.0
    %273 = vmatpush1.msra.mxu0 0.0
    %274 = vmatprep.subr.mxu0 0.0
    %275 = vmatpush1.msra.mxu0 0.0
    %276 = vmatprep.subr.mxu0 0.0
    %277 = vmatpush1.msra.mxu0 0.0
    %278 = vmatprep.subr.mxu0 0.0
    %279 = vmatpush1.msra.mxu0 0.0
    %280 = vmatprep.subr.mxu0 0.0
    %281 = vmatpush1.msra.mxu0 0.0
    %282 = vmatprep.subr.mxu0 0.0
    %283 = vmatpush1.msra.mxu0 0.0
    %284 = vmatprep.subr.mxu0 0.0
    %285 = vmatpush1.msra.mxu0 0.0
    %286 = vmatprep.subr.mxu0 0.0
    %287 = vmatpush1.msra.mxu0 0.0
    %288 = vmatprep.subr.mxu0 0.0
    %289 = vmatpush1.msra.mxu0 0.0
    %290 = vmatprep.subr.mxu0 0.0
    %291 = vmatpush1.msra.mxu0 0.0
    %292 = vmatprep.mubr.f32.mxu0 0.0
    %293 = vmatmul.mubr.f32.gmra.mrb[0].mxu0 %v223
    %v294 = vpop.f32.mrb[0].mxu0
    %v295 = vadd.f32 %v220, %v294
    %v296 = vpop.f32.mrb[0].mxu0
    %297 = vmatprep.mubr.f32.mxu0 0.0
    %298 = vmatmul.mubr.f32.gmra.mrb[0].mxu0 %v226
    %v299 = vpop.f32.mrb[0].mxu0
    %v300 = vadd.f32 %v220, %v299
    %v301 = vpop.f32.mrb[0].mxu0
    %302 = vdwg.mxu0
    %303 = vst.msk [vmem:[#allocation17] sm:$0xff] %vm151, %v295
    %304 = vst.msk [vmem:[#allocation17 + $0x8] sm:$0xff] %vm151, %v300
    %v305 = vld [vmem:[#allocation10] sm:$0xff]
    %v306 = vld [vmem:[#allocation10 + $0x8] sm:$0xff]
    %v307 = vld [vmem:[#allocation10 + $0x10] sm:$0xff]
    %v308 = vld [vmem:[#allocation10 + $0x18] sm:$0xff]
    %v309 = vld [vmem:[#allocation14] sm:$0x1]
    %v311 = vlaneseq
    %v312 = vshrl.u32 %v311, 7
    %v313 = vsub.s32 0, %v312
    %v314 = vrot.slane %v309, %v313
    %316 = vmatprep.subr.mxu0 0.0
    %317 = vmatpush1.msra.mxu0 %v305
    %318 = vmatprep.subr.mxu0 0.0
    %319 = vmatpush1.msra.mxu0 %v306
    %320 = vmatprep.subr.mxu0 0.0
    %321 = vmatpush1.msra.mxu0 %v307
    %322 = vmatprep.subr.mxu0 0.0
    %323 = vmatpush1.msra.mxu0 %v308
    %324 = vmatprep.subr.mxu0 0.0
    %325 = vmatpush1.msra.mxu0 0.0
    %326 = vmatprep.subr.mxu0 0.0
    %327 = vmatpush1.msra.mxu0 0.0
    %328 = vmatprep.subr.mxu0 0.0
    %329 = vmatpush1.msra.mxu0 0.0
    %330 = vmatprep.subr.mxu0 0.0
    %331 = vmatpush1.msra.mxu0 0.0
    %332 = vmatprep.subr.mxu0 0.0
    %333 = vmatpush1.msra.mxu0 0.0
    %334 = vmatprep.subr.mxu0 0.0
    %335 = vmatpush1.msra.mxu0 0.0
    %336 = vmatprep.subr.mxu0 0.0
    %337 = vmatpush1.msra.mxu0 0.0
    %338 = vmatprep.subr.mxu0 0.0
    %339 = vmatpush1.msra.mxu0 0.0
    %340 = vmatprep.subr.mxu0 0.0
    %341 = vmatpush1.msra.mxu0 0.0
    %342 = vmatprep.subr.mxu0 0.0
    %343 = vmatpush1.msra.mxu0 0.0
    %344 = vmatprep.subr.mxu0 0.0
    %345 = vmatpush1.msra.mxu0 0.0
    %346 = vmatprep.subr.mxu0 0.0
    %347 = vmatpush1.msra.mxu0 0.0
    %348 = vmatprep.subr.mxu0 0.0
    %349 = vmatpush1.msra.mxu0 0.0
    %350 = vmatprep.subr.mxu0 0.0
    %351 = vmatpush1.msra.mxu0 0.0
    %352 = vmatprep.subr.mxu0 0.0
    %353 = vmatpush1.msra.mxu0 0.0
    %354 = vmatprep.subr.mxu0 0.0
    %355 = vmatpush1.msra.mxu0 0.0
    %356 = vmatprep.subr.mxu0 0.0
    %357 = vmatpush1.msra.mxu0 0.0
    %358 = vmatprep.subr.mxu0 0.0
    %359 = vmatpush1.msra.mxu0 0.0
    %360 = vmatprep.subr.mxu0 0.0
    %361 = vmatpush1.msra.mxu0 0.0
    %362 = vmatprep.subr.mxu0 0.0
    %363 = vmatpush1.msra.mxu0 0.0
    %364 = vmatprep.subr.mxu0 0.0
    %365 = vmatpush1.msra.mxu0 0.0
    %366 = vmatprep.subr.mxu0 0.0
    %367 = vmatpush1.msra.mxu0 0.0
    %368 = vmatprep.subr.mxu0 0.0
    %369 = vmatpush1.msra.mxu0 0.0
    %370 = vmatprep.subr.mxu0 0.0
    %371 = vmatpush1.msra.mxu0 0.0
    %372 = vmatprep.subr.mxu0 0.0
    %373 = vmatpush1.msra.mxu0 0.0
    %374 = vmatprep.subr.mxu0 0.0
    %375 = vmatpush1.msra.mxu0 0.0
    %376 = vmatprep.subr.mxu0 0.0
    %377 = vmatpush1.msra.mxu0 0.0
    %378 = vmatprep.subr.mxu0 0.0
    %379 = vmatpush1.msra.mxu0 0.0
    %380 = vmatprep.mubr.f32.mxu0 0.0
    %381 = vmatmul.mubr.f32.gmra.mrb[0].mxu0 %v223
    %v382 = vpop.f32.mrb[0].mxu0
    %v383 = vadd.f32 %v314, %v382
    %v384 = vpop.f32.mrb[0].mxu0
    %385 = vmatprep.mubr.f32.mxu0 0.0
    %386 = vmatmul.mubr.f32.gmra.mrb[0].mxu0 %v226
    %v387 = vpop.f32.mrb[0].mxu0
    %v388 = vadd.f32 %v314, %v387
    %v389 = vpop.f32.mrb[0].mxu0
    %390 = vdwg.mxu0
    %391 = vst.msk [vmem:[#allocation18] sm:$0xff] %vm151, %v383
    %392 = vst.msk [vmem:[#allocation18 + $0x8] sm:$0xff] %vm151, %v388
    %v393 = vld [vmem:[#allocation11] sm:$0xff]
    %v394 = vld [vmem:[#allocation11 + $0x8] sm:$0xff]
    %v395 = vld [vmem:[#allocation11 + $0x10] sm:$0xff]
    %v396 = vld [vmem:[#allocation11 + $0x18] sm:$0xff]
    %v397 = vld [vmem:[#allocation16] sm:$0x1]
    %v399 = vlaneseq
    %v400 = vshrl.u32 %v399, 7
    %v401 = vsub.s32 0, %v400
    %v402 = vrot.slane %v397, %v401
    %404 = vmatprep.subr.mxu0 0.0
    %405 = vmatpush1.msra.mxu0 %v393
    %406 = vmatprep.subr.mxu0 0.0
    %407 = vmatpush1.msra.mxu0 %v394
    %408 = vmatprep.subr.mxu0 0.0
    %409 = vmatpush1.msra.mxu0 %v395
    %410 = vmatprep.subr.mxu0 0.0
    %411 = vmatpush1.msra.mxu0 %v396
    %412 = vmatprep.subr.mxu0 0.0
    %413 = vmatpush1.msra.mxu0 0.0
    %414 = vmatprep.subr.mxu0 0.0
    %415 = vmatpush1.msra.mxu0 0.0
    %416 = vmatprep.subr.mxu0 0.0
    %417 = vmatpush1.msra.mxu0 0.0
    %418 = vmatprep.subr.mxu0 0.0
    %419 = vmatpush1.msra.mxu0 0.0
    %420 = vmatprep.subr.mxu0 0.0
    %421 = vmatpush1.msra.mxu0 0.0
    %422 = vmatprep.subr.mxu0 0.0
    %423 = vmatpush1.msra.mxu0 0.0
    %424 = vmatprep.subr.mxu0 0.0
    %425 = vmatpush1.msra.mxu0 0.0
    %426 = vmatprep.subr.mxu0 0.0
    %427 = vmatpush1.msra.mxu0 0.0
    %428 = vmatprep.subr.mxu0 0.0
    %429 = vmatpush1.msra.mxu0 0.0
    %430 = vmatprep.subr.mxu0 0.0
    %431 = vmatpush1.msra.mxu0 0.0
    %432 = vmatprep.subr.mxu0 0.0
    %433 = vmatpush1.msra.mxu0 0.0
    %434 = vmatprep.subr.mxu0 0.0
    %435 = vmatpush1.msra.mxu0 0.0
    %436 = vmatprep.subr.mxu0 0.0
    %437 = vmatpush1.msra.mxu0 0.0
    %438 = vmatprep.subr.mxu0 0.0
    %439 = vmatpush1.msra.mxu0 0.0
    %440 = vmatprep.subr.mxu0 0.0
    %441 = vmatpush1.msra.mxu0 0.0
    %442 = vmatprep.subr.mxu0 0.0
    %443 = vmatpush1.msra.mxu0 0.0
    %444 = vmatprep.subr.mxu0 0.0
    %445 = vmatpush1.msra.mxu0 0.0
    %446 = vmatprep.subr.mxu0 0.0
    %447 = vmatpush1.msra.mxu0 0.0
    %448 = vmatprep.subr.mxu0 0.0
    %449 = vmatpush1.msra.mxu0 0.0
    %450 = vmatprep.subr.mxu0 0.0
    %451 = vmatpush1.msra.mxu0 0.0
    %452 = vmatprep.subr.mxu0 0.0
    %453 = vmatpush1.msra.mxu0 0.0
    %454 = vmatprep.subr.mxu0 0.0
    %455 = vmatpush1.msra.mxu0 0.0
    %456 = vmatprep.subr.mxu0 0.0
    %457 = vmatpush1.msra.mxu0 0.0
    %458 = vmatprep.subr.mxu0 0.0
    %459 = vmatpush1.msra.mxu0 0.0
    %460 = vmatprep.subr.mxu0 0.0
    %461 = vmatpush1.msra.mxu0 0.0
    %462 = vmatprep.subr.mxu0 0.0
    %463 = vmatpush1.msra.mxu0 0.0
    %464 = vmatprep.subr.mxu0 0.0
    %465 = vmatpush1.msra.mxu0 0.0
    %466 = vmatprep.subr.mxu0 0.0
    %467 = vmatpush1.msra.mxu0 0.0
    %468 = vmatprep.mubr.f32.mxu0 0.0
    %469 = vmatmul.mubr.f32.gmra.mrb[0].mxu0 %v223
    %v470 = vpop.f32.mrb[0].mxu0
    %v471 = vadd.f32 %v402, %v470
    %v472 = vpop.f32.mrb[0].mxu0
    %473 = vmatprep.mubr.f32.mxu0 0.0
    %474 = vmatmul.mubr.f32.gmra.mrb[0].mxu0 %v226
    %v475 = vpop.f32.mrb[0].mxu0
    %v476 = vadd.f32 %v402, %v475
    %v477 = vpop.f32.mrb[0].mxu0
    %478 = vdwg.mxu0
    %479 = vst.msk [vmem:[#allocation20] sm:$0xff] %vm151, %v471
    %480 = vst.msk [vmem:[#allocation20 + $0x8] sm:$0xff] %vm151, %v476
    // Predicated region
    $region74: #{tpu_custom_call.1} parent=1 // pred_check
      _
    $region75: #{tpu_custom_call.1} parent=1 // pred_check_branch
      %482 = sbr.rel (0) target = $region77
    $region76: #{tpu_custom_call.1} parent=1 // pred_region
      %s484 = ssub.s32 256, 256
      %485 = vsyncadd [#allocation4], %s484
      %s486 = sshll.u32 [#allocation17], 4
      %s487 = int_to_ptr.vmem [resolvable:$true] %s486
      %492 = dma.vmem_to_hbm [thread:$0]  %s487, 256, %s9, [#allocation4], 128, 128, 8
    $region77: #{tpu_custom_call.1} parent=1 // pred_fallthru
      _
    // Predicated region
    $region78: #{tpu_custom_call.1} parent=1 // pred_check
      _
    $region79: #{tpu_custom_call.1} parent=1 // pred_check_branch
      %494 = sbr.rel (0) target = $region81
    $region80: #{tpu_custom_call.1} parent=1 // pred_region
      %s496 = ssub.s32 256, 256
      %497 = vsyncadd [#allocation19], %s496
      %s498 = sshll.u32 [#allocation18], 4
      %s499 = int_to_ptr.vmem [resolvable:$true] %s498
      %504 = dma.vmem_to_hbm [thread:$0]  %s499, 256, %s10, [#allocation19], 128, 128, 8
    $region81: #{tpu_custom_call.1} parent=1 // pred_fallthru
      _
    // Predicated region
    $region82: #{tpu_custom_call.1} parent=1 // pred_check
      _
    $region83: #{tpu_custom_call.1} parent=1 // pred_check_branch
      %506 = sbr.rel (0) target = $region85
    $region84: #{tpu_custom_call.1} parent=1 // pred_region
      %s508 = ssub.s32 256, 256
      %509 = vsyncadd [#allocation19], %s508
      %s510 = sshll.u32 [#allocation20], 4
      %s511 = int_to_ptr.vmem [resolvable:$true] %s510
      %516 = dma.vmem_to_hbm [thread:$0]  %s511, 256, %s11, [#allocation19], 128, 128, 8
    $region85: #{tpu_custom_call.1} parent=1 // pred_fallthru
      _
    // Predicated region
    $region86: #{tpu_custom_call.1} parent=1 // pred_check
      _
    $region87: #{tpu_custom_call.1} parent=1 // pred_check_branch
      %518 = sbr.rel (0) target = $region89
    $region88: #{tpu_custom_call.1} parent=1 // pred_region
      %519 = dma.done [#allocation4], 256
    $region89: #{tpu_custom_call.1} parent=1 // pred_fallthru
      _
    // Predicated region
    $region90: #{tpu_custom_call.1} parent=1 // pred_check
      _
    $region91: #{tpu_custom_call.1} parent=1 // pred_check_branch
      %521 = sbr.rel (0) target = $region93
    $region92: #{tpu_custom_call.1} parent=1 // pred_region
      %522 = dma.done [#allocation19], 256
    $region93: #{tpu_custom_call.1} parent=1 // pred_fallthru
      _
    // Predicated region
    $region94: #{tpu_custom_call.1} parent=1 // pred_check
      _
    $region95: #{tpu_custom_call.1} parent=1 // pred_check_branch
      %524 = sbr.rel (0) target = $region97
    $region96: #{tpu_custom_call.1} parent=1 // pred_region
      %525 = dma.done [#allocation19], 256
    $region97: #{tpu_custom_call.1} parent=1 // pred_fallthru
      _
    %526 = vsyncpa [#allocation3], 1
    %527 = vsyncpa [#allocation6], 1
    %528 = vsyncpa [#allocation9], 1
    %529 = vsyncpa [#allocation12], 1
    %530 = vsyncpa [#allocation15], 1
    %531 = vsyncpa [#allocation4], 1
    %532 = vsyncpa [#allocation19], 1

</llo_original>
